<compile_context>
chip_gen: v5e
topology: v5e:2x2
jax: 0.10.0
libtpu: 0.0.40
codegen_flags: <defaults>
</compile_context>

<pallas_src>
import jax
import jax.numpy as jnp
from jax.experimental import pallas as pl
from jax.experimental.pallas import tpu as pltpu

hidden_dim = 256
image_size = 28 * 28        # 784
num_classes = 10
z_dim = 100

K_IN = 128                  # z_dim + num_classes = 110, lane-padded to 128
OUT_PAD = 896               # 784 padded to 7 * 128 for lane-dense output stores


def _round_up(x, m):
    return (x + m - 1) // m * m


def _generator_kernel(x_ref, w1_ref, b1_ref, w2_ref, b2_ref, w3_ref, b3_ref, out_ref):
    # x_ref: (BT, 128) bf16 = [z | label_emb | zero-pad]
    # Matmuls accumulate in f32 on the MXU; bias/ReLU/tanh run in f32.
    h1 = jnp.dot(x_ref[...], w1_ref[...], preferred_element_type=jnp.float32)
    h1 = jnp.maximum(h1 + b1_ref[...], 0.0).astype(jnp.bfloat16)

    h2 = jnp.dot(h1, w2_ref[...], preferred_element_type=jnp.float32)
    h2 = jnp.maximum(h2 + b2_ref[...], 0.0).astype(jnp.bfloat16)

    o = jnp.dot(h2, w3_ref[...], preferred_element_type=jnp.float32) + b3_ref[...]
    out_ref[...] = jnp.tanh(o).astype(out_ref.dtype)


def prepare_kernel_params(params):
    """Pad + cast the f32 'PyTorch' params into the kernel's bf16/padded layout."""
    w1p = jnp.zeros((K_IN, hidden_dim), jnp.float32)
    w1p = w1p.at[: z_dim + num_classes, :].set(params["w1"])
    w3p = jnp.zeros((hidden_dim, OUT_PAD), jnp.float32)
    w3p = w3p.at[:, :image_size].set(params["w3"])
    b3p = jnp.zeros((1, OUT_PAD), jnp.float32)          # pad columns stay 0
    b3p = b3p.at[:, :image_size].set(params["b3"])
    return {
        "w1": w1p.astype(jnp.bfloat16),
        "b1": params["b1"],                              # f32, added to f32 acc
        "w2": params["w2"].astype(jnp.bfloat16),
        "b2": params["b2"],
        "w3": w3p.astype(jnp.bfloat16),
        "b3": b3p,
    }


def generator_forward(z, labels, params, *, block_b=256):
    """z: (B, z_dim) f32, labels: (B,) int32."""
    B = z.shape[0]

    # Embedding lookup + concat + lane-pad to K=128 (wrapper glue; gather only).
    # NOTE: JAX gather clamps out-of-range labels while torch.nn.Embedding errors.
    emb = params["emb"][labels]                                   # (B, 10)
    x = jnp.concatenate([z, emb], axis=1)                         # (B, 110)
    x = jnp.pad(x, ((0, 0), (0, K_IN - x.shape[1])))              # (B, 128)

    # Batch tiling (sublane-aligned, pad B up to a multiple of the tile).
    bt = min(block_b, _round_up(B, 8))
    b_pad = _round_up(B, bt)
    if b_pad != B:
        x = jnp.pad(x, ((0, b_pad - B), (0, 0)))
    x = x.astype(jnp.bfloat16)

    kp = params["kernel"]
    out = pl.pallas_call(
        _generator_kernel,
        out_shape=jax.ShapeDtypeStruct((b_pad, OUT_PAD), jnp.float32),
        grid=(b_pad // bt,),
        in_specs=[
            pl.BlockSpec((bt, K_IN), lambda i: (i, 0)),            # streamed input
            pl.BlockSpec((K_IN, hidden_dim), lambda i: (0, 0)),    # resident weights
            pl.BlockSpec((1, hidden_dim), lambda i: (0, 0)),
            pl.BlockSpec((hidden_dim, hidden_dim), lambda i: (0, 0)),
            pl.BlockSpec((1, hidden_dim), lambda i: (0, 0)),
            pl.BlockSpec((hidden_dim, OUT_PAD), lambda i: (0, 0)),
            pl.BlockSpec((1, OUT_PAD), lambda i: (0, 0)),
        ],
        out_specs=pl.BlockSpec((bt, OUT_PAD), lambda i: (i, 0)),
        compiler_params=pltpu.CompilerParams(
            dimension_semantics=("parallel",),   # batch tiles shard across v7x's 2 TCs
        ),
    )(x, kp["w1"], kp["b1"], kp["w2"], kp["b2"], kp["w3"], kp["b3"])

    return out[:B, :image_size]


def init_params(key):
    """Deterministic synthetic weights with PyTorch-default-like scaling."""
    ks = jax.random.split(key, 7)

    def linear_init(kw, kb, fan_in, fan_out):
        bound = 1.0 / jnp.sqrt(fan_in)
        w = jax.random.uniform(kw, (fan_in, fan_out), jnp.float32, -bound, bound)
        b = jax.random.uniform(kb, (1, fan_out), jnp.float32, -bound, bound)
        return w, b

    emb = jax.random.normal(ks[0], (num_classes, num_classes), jnp.float32)
    w1, b1 = linear_init(ks[1], ks[2], z_dim + num_classes, hidden_dim)
    w2, b2 = linear_init(ks[3], ks[4], hidden_dim, hidden_dim)
    w3, b3 = linear_init(ks[5], ks[6], hidden_dim, image_size)

    params = {"emb": emb, "w1": w1, "b1": b1, "w2": w2, "b2": b2, "w3": w3, "b3": b3}
    params["kernel"] = prepare_kernel_params(params)
    return params


def reference_forward_f32(z, labels, params):
    """Pure-JAX f32 reference mirroring the PyTorch module exactly."""
    emb = params["emb"][labels]
    x = jnp.concatenate([z, emb], axis=1)
    h1 = jnp.maximum(x @ params["w1"] + params["b1"], 0.0)
    h2 = jnp.maximum(h1 @ params["w2"] + params["b2"], 0.0)
    return jnp.tanh(h2 @ params["w3"] + params["b3"])


def reference_forward_bf16(z, labels, params):
    """Reference matching the kernel's quantization: bf16 operands, f32 accumulation."""
    emb = params["emb"][labels]
    x = jnp.concatenate([z, emb], axis=1).astype(jnp.bfloat16)

    def mm(a, w):
        return jnp.dot(a, w.astype(jnp.bfloat16), preferred_element_type=jnp.float32)

    h1 = jnp.maximum(mm(x, params["w1"]) + params["b1"], 0.0).astype(jnp.bfloat16)
    h2 = jnp.maximum(mm(h1, params["w2"]) + params["b2"], 0.0).astype(jnp.bfloat16)
    return jnp.tanh(mm(h2, params["w3"]) + params["b3"])


if __name__ == "__main__":
    key = jax.random.PRNGKey(0)
    k_param, k_z, k_lbl = jax.random.split(key, 3)

    params = init_params(k_param)

    # Small run (single grid step).
    B = 8
    z = jax.random.normal(k_z, (B, z_dim), jnp.float32)
    labels = jax.random.randint(k_lbl, (B,), 0, num_classes, dtype=jnp.int32)

    out = jax.block_until_ready(generator_forward(z, labels, params))
    assert out.shape == (B, image_size)

    ref_bf16 = reference_forward_bf16(z, labels, params)
    assert jnp.allclose(out, ref_bf16, atol=2e-3, rtol=2e-3), (
        "max |kernel - bf16 ref| = %f" % float(jnp.max(jnp.abs(out - ref_bf16))))

    ref_f32 = reference_forward_f32(z, labels, params)   # loose: bf16 quantization noise
    assert jnp.allclose(out, ref_f32, atol=1e-1, rtol=1e-1), (
        "max |kernel - f32 ref| = %f" % float(jnp.max(jnp.abs(out - ref_f32))))

    # Second run: exercises a multi-step grid (4 tiles) + batch padding (200 -> 256).
    B2 = 200
    z2 = jax.random.normal(jax.random.fold_in(k_z, 1), (B2, z_dim), jnp.float32)
    labels2 = jax.random.randint(jax.random.fold_in(k_lbl, 1), (B2,), 0, num_classes,
                                 dtype=jnp.int32)
    out2 = jax.block_until_ready(generator_forward(z2, labels2, params, block_b=64))
    assert out2.shape == (B2, image_size)
    ref2 = reference_forward_bf16(z2, labels2, params)
    assert jnp.allclose(out2, ref2, atol=2e-3, rtol=2e-3)

    print("KERNEL_OK")
</pallas_src>

<mosaic_0001>
module attributes {stable_mosaic.version = 11 : i64} {
  func.func @_generator_kernel(%arg0: i32, %arg1: memref<8x128xbf16, #tpu.memory_space<vmem>>, %arg2: memref<128x256xbf16, #tpu.memory_space<vmem>>, %arg3: memref<1x256xf32, #tpu.memory_space<vmem>>, %arg4: memref<256x256xbf16, #tpu.memory_space<vmem>>, %arg5: memref<1x256xf32, #tpu.memory_space<vmem>>, %arg6: memref<256x896xbf16, #tpu.memory_space<vmem>>, %arg7: memref<1x896xf32, #tpu.memory_space<vmem>>, %arg8: memref<8x896xf32, #tpu.memory_space<vmem>>) attributes {dimension_semantics = [#tpu.dimension_semantics<parallel>], iteration_bounds = array<i64: 1>, scalar_prefetch = 0 : i64, scratch_operands = 0 : i64, tpu.core_type = #tpu.core_type<tc>, window_params = [{transform_indices = @transform_0, window_bounds = array<i64: 8, 128>}, {pipeline_mode = #tpu.pipeline_mode<synchronous>, transform_indices = @transform_1, window_bounds = array<i64: 128, 256>}, {pipeline_mode = #tpu.pipeline_mode<synchronous>, transform_indices = @transform_2, window_bounds = array<i64: 1, 256>}, {pipeline_mode = #tpu.pipeline_mode<synchronous>, transform_indices = @transform_3, window_bounds = array<i64: 256, 256>}, {pipeline_mode = #tpu.pipeline_mode<synchronous>, transform_indices = @transform_4, window_bounds = array<i64: 1, 256>}, {pipeline_mode = #tpu.pipeline_mode<synchronous>, transform_indices = @transform_5, window_bounds = array<i64: 256, 896>}, {pipeline_mode = #tpu.pipeline_mode<synchronous>, transform_indices = @transform_6, window_bounds = array<i64: 1, 896>}, {transform_indices = @transform_7, window_bounds = array<i64: 8, 896>}]} {
    %c0 = arith.constant 0 : index
    %c0_0 = arith.constant 0 : index
    %0 = vector.load %arg1[%c0, %c0_0] : memref<8x128xbf16, #tpu.memory_space<vmem>>, vector<8x128xbf16>
    %c0_1 = arith.constant 0 : index
    %c0_2 = arith.constant 0 : index
    %1 = vector.load %arg2[%c0_1, %c0_2] : memref<128x256xbf16, #tpu.memory_space<vmem>>, vector<128x256xbf16>
    %cst = arith.constant dense<0.000000e+00> : vector<8x256xf32>
    %2 = tpu.matmul %0, %1, %cst {dimension_numbers = #tpu.dot_dimension_numbers<[1], [0], [0], [1], [0, 0, 1, 1], [], []>} : vector<8x128xbf16>, vector<128x256xbf16>, vector<8x256xf32> -> vector<8x256xf32>
    %c0_3 = arith.constant 0 : index
    %c0_4 = arith.constant 0 : index
    %3 = vector.load %arg3[%c0_3, %c0_4] : memref<1x256xf32, #tpu.memory_space<vmem>>, vector<1x256xf32>
    %4 = vector.broadcast %3 : vector<1x256xf32> to vector<8x256xf32>
    %5 = arith.addf %2, %4 : vector<8x256xf32>
    %cst_5 = arith.constant 0.000000e+00 : f32
    %6 = vector.broadcast %cst_5 : f32 to vector<8x256xf32>
    %7 = arith.maximumf %5, %6 : vector<8x256xf32>
    %8 = arith.truncf %7 : vector<8x256xf32> to vector<8x256xbf16>
    %c0_6 = arith.constant 0 : index
    %c0_7 = arith.constant 0 : index
    %9 = vector.load %arg4[%c0_6, %c0_7] : memref<256x256xbf16, #tpu.memory_space<vmem>>, vector<256x256xbf16>
    %cst_8 = arith.constant dense<0.000000e+00> : vector<8x256xf32>
    %10 = tpu.matmul %8, %9, %cst_8 {dimension_numbers = #tpu.dot_dimension_numbers<[1], [0], [0], [1], [0, 0, 1, 1], [], []>} : vector<8x256xbf16>, vector<256x256xbf16>, vector<8x256xf32> -> vector<8x256xf32>
    %c0_9 = arith.constant 0 : index
    %c0_10 = arith.constant 0 : index
    %11 = vector.load %arg5[%c0_9, %c0_10] : memref<1x256xf32, #tpu.memory_space<vmem>>, vector<1x256xf32>
    %12 = vector.broadcast %11 : vector<1x256xf32> to vector<8x256xf32>
    %13 = arith.addf %10, %12 : vector<8x256xf32>
    %cst_11 = arith.constant 0.000000e+00 : f32
    %14 = vector.broadcast %cst_11 : f32 to vector<8x256xf32>
    %15 = arith.maximumf %13, %14 : vector<8x256xf32>
    %16 = arith.truncf %15 : vector<8x256xf32> to vector<8x256xbf16>
    %c0_12 = arith.constant 0 : index
    %c0_13 = arith.constant 0 : index
    %17 = vector.load %arg6[%c0_12, %c0_13] : memref<256x896xbf16, #tpu.memory_space<vmem>>, vector<256x896xbf16>
    %cst_14 = arith.constant dense<0.000000e+00> : vector<8x896xf32>
    %18 = tpu.matmul %16, %17, %cst_14 {dimension_numbers = #tpu.dot_dimension_numbers<[1], [0], [0], [1], [0, 0, 1, 1], [], []>} : vector<8x256xbf16>, vector<256x896xbf16>, vector<8x896xf32> -> vector<8x896xf32>
    %c0_15 = arith.constant 0 : index
    %c0_16 = arith.constant 0 : index
    %19 = vector.load %arg7[%c0_15, %c0_16] : memref<1x896xf32, #tpu.memory_space<vmem>>, vector<1x896xf32>
    %20 = vector.broadcast %19 : vector<1x896xf32> to vector<8x896xf32>
    %21 = arith.addf %18, %20 : vector<8x896xf32>
    %22 = math.tanh %21 : vector<8x896xf32>
    %c0_17 = arith.constant 0 : index
    %c0_18 = arith.constant 0 : index
    %23 = vector.load %arg8[%c0_17, %c0_18] : memref<8x896xf32, #tpu.memory_space<vmem>>, vector<8x896xf32>
    tpu.vector_store %arg8[%c0_17, %c0_18], %22 {strides = array<i32>} : memref<8x896xf32, #tpu.memory_space<vmem>>, vector<8x896xf32>,
    return
  }
  func.func @transform_0(%arg0: i32) -> (i32, i32) {
    %c0_i32 = arith.constant 0 : i32
    %c0_i32_0 = arith.constant 0 : i32
    return %arg0, %c0_i32 : i32, i32
  }
  func.func @transform_1(%arg0: i32) -> (i32, i32) {
    %c0_i32 = arith.constant 0 : i32
    %c0_i32_0 = arith.constant 0 : i32
    %c0_i32_1 = arith.constant 0 : i32
    return %c0_i32, %c0_i32_0 : i32, i32
  }
  func.func @transform_2(%arg0: i32) -> (i32, i32) {
    %c0_i32 = arith.constant 0 : i32
    %c0_i32_0 = arith.constant 0 : i32
    %c0_i32_1 = arith.constant 0 : i32
    return %c0_i32, %c0_i32_0 : i32, i32
  }
  func.func @transform_3(%arg0: i32) -> (i32, i32) {
    %c0_i32 = arith.constant 0 : i32
    %c0_i32_0 = arith.constant 0 : i32
    %c0_i32_1 = arith.constant 0 : i32
    return %c0_i32, %c0_i32_0 : i32, i32
  }
  func.func @transform_4(%arg0: i32) -> (i32, i32) {
    %c0_i32 = arith.constant 0 : i32
    %c0_i32_0 = arith.constant 0 : i32
    %c0_i32_1 = arith.constant 0 : i32
    return %c0_i32, %c0_i32_0 : i32, i32
  }
  func.func @transform_5(%arg0: i32) -> (i32, i32) {
    %c0_i32 = arith.constant 0 : i32
    %c0_i32_0 = arith.constant 0 : i32
    %c0_i32_1 = arith.constant 0 : i32
    return %c0_i32, %c0_i32_0 : i32, i32
  }
  func.func @transform_6(%arg0: i32) -> (i32, i32) {
    %c0_i32 = arith.constant 0 : i32
    %c0_i32_0 = arith.constant 0 : i32
    %c0_i32_1 = arith.constant 0 : i32
    return %c0_i32, %c0_i32_0 : i32, i32
  }
  func.func @transform_7(%arg0: i32) -> (i32, i32) {
    %c0_i32 = arith.constant 0 : i32
    %c0_i32_0 = arith.constant 0 : i32
    return %arg0, %c0_i32 : i32, i32
  }
}

</mosaic_0001>

<llo_original>
// kernel: tpu_custom_call.1
$region0: #{tpu_custom_call.1}
  #allocation0 [shape = 'u32[]', space=smem, size = 0x4, offset = 0x4, fixed_abs, tag = 'smem constant byte address 0x4 - core index']
  #allocation1 [shape = 'u32[72,128]{1,0:T(1,128)}', space=vmem, size = 0x9000, scoped, tag = 'internal scratch']
  %s0 = inlined_call_operand.hbm [shape: bf16[8,128], index: 0, kind: input, shape index: {}]
  %s1 = inlined_call_operand.hbm [shape: bf16[128,256], index: 1, kind: input, shape index: {}]
  %s2 = inlined_call_operand.hbm [shape: f32[1,256], index: 2, kind: input, shape index: {}]
  %s3 = inlined_call_operand.hbm [shape: bf16[256,256], index: 3, kind: input, shape index: {}]
  %s4 = inlined_call_operand.vmem [shape: f32[1,256], index: 4, kind: input, shape index: {}]
  %s5 = inlined_call_operand.hbm [shape: bf16[256,896], index: 5, kind: input, shape index: {}]
  %s6 = inlined_call_operand.hbm [shape: f32[1,896], index: 6, kind: input, shape index: {}]
  %s7 = inlined_call_operand.hbm [shape: f32[8,896], index: 7, kind: output, shape index: {}]
  %s8 = sld [smem:[#allocation0]]
  $region62: #{tpu_custom_call.1} parent=0
    _
  %s10 = ssub.s32 1, %s8
  %s11 = scalar_select 0, %s10, %s8
  $region1: #{tpu_custom_call.1} parent=0
    #allocation2 [shape = 'u8[2048]{0}', space=vmem, size = 0x800, scoped, tag = 'input window, operand 0, single buffered']
    #allocation3 [shape = 's32[1]{0}', space=sflag, size = 0x4, scoped, tag = 'scoped memory for tpu_custom_call.1']
    #allocation4 [shape = 's32[1]{0}', space=sflag, size = 0x4, scoped, tag = 'scoped memory for tpu_custom_call.1']
    #allocation5 [shape = 'u8[65536]{0}', space=vmem, size = 0x10000, scoped, tag = 'input window, operand 1, single buffered']
    #allocation6 [shape = 's32[1]{0}', space=sflag, size = 0x4, scoped, tag = 'scoped memory for tpu_custom_call.1']
    #allocation7 [shape = 'u8[1024]{0}', space=vmem, size = 0x400, scoped, tag = 'input window, operand 2, single buffered']
    #allocation8 [shape = 'u8[131072]{0}', space=vmem, size = 0x20000, scoped, tag = 'input window, operand 3, single buffered']
    #allocation9 [shape = 's32[1]{0}', space=sflag, size = 0x4, scoped, tag = 'scoped memory for tpu_custom_call.1']
    #allocation10 [shape = 'u8[458752]{0}', space=vmem, size = 0x70000, scoped, tag = 'input window, operand 5, single buffered']
    #allocation11 [shape = 'u8[3584]{0}', space=vmem, size = 0x1000, scoped, tag = 'input window, operand 6, single buffered']
    #allocation12 [shape = 's32[1]{0}', space=sflag, size = 0x4, scoped, tag = 'scoped memory for tpu_custom_call.1']
    #allocation13 [shape = 'u8[28672]{0}', space=vmem, size = 0x7000, scoped, tag = 'output window, operand 0, single buffered']
    %12 = vsyncpa [#allocation3], 0
    %13 = vsyncpa [#allocation6], 0
    %14 = vsyncpa [#allocation9], 0
    %15 = vsyncpa [#allocation12], 0
    %16 = vsyncpa [#allocation4], 0
    // Predicated region
    $region2: #{tpu_custom_call.1} parent=1 // pred_check
      _
    $region3: #{tpu_custom_call.1} parent=1 // pred_check_branch
      %18 = sbr.rel (0) target = $region5
    $region4: #{tpu_custom_call.1} parent=1 // pred_region
      %20 = vsyncadd [#allocation3], 0
      %s22 = sshll.u32 %s0, 4
      %s23 = int_to_ptr.hbm [resolvable:$true] %s22
      %s24 = sshll.u32 [#allocation2], 4
      %s25 = int_to_ptr.vmem [resolvable:$true] %s24
      %27 = dma.hbm_to_vmem [thread:$0]  %s23, 64, %s25, [#allocation3]
    $region5: #{tpu_custom_call.1} parent=1 // pred_fallthru
      _
    // Predicated region
    $region6: #{tpu_custom_call.1} parent=1 // pred_check
      _
    $region7: #{tpu_custom_call.1} parent=1 // pred_check_branch
      %29 = sbr.rel (0) target = $region9
    $region8: #{tpu_custom_call.1} parent=1 // pred_region
      %31 = vsyncadd [#allocation6], 0
      %s32 = sshll.u32 %s1, 4
      %s33 = int_to_ptr.hbm [resolvable:$true] %s32
      %s34 = sshll.u32 [#allocation5], 4
      %s35 = int_to_ptr.vmem [resolvable:$true] %s34
      %40 = dma.hbm_to_vmem [thread:$0]  %s33, 2048, %s35, [#allocation6], 128, 128, 8
    $region9: #{tpu_custom_call.1} parent=1 // pred_fallthru
      _
    // Predicated region
    $region10: #{tpu_custom_call.1} parent=1 // pred_check
      _
    $region11: #{tpu_custom_call.1} parent=1 // pred_check_branch
      %42 = sbr.rel (0) target = $region13
    $region12: #{tpu_custom_call.1} parent=1 // pred_region
      %44 = vsyncadd [#allocation6], 0
      %s46 = sshll.u32 %s2, 4
      %s47 = int_to_ptr.hbm [resolvable:$true] %s46
      %s48 = sshll.u32 [#allocation7], 4
      %s49 = int_to_ptr.vmem [resolvable:$true] %s48
      %51 = dma.hbm_to_vmem [thread:$0]  %s47, 32, %s49, [#allocation6]
    $region13: #{tpu_custom_call.1} parent=1 // pred_fallthru
      _
    // Predicated region
    $region14: #{tpu_custom_call.1} parent=1 // pred_check
      _
    $region15: #{tpu_custom_call.1} parent=1 // pred_check_branch
      %53 = sbr.rel (0) target = $region17
    $region16: #{tpu_custom_call.1} parent=1 // pred_region
      %55 = vsyncadd [#allocation9], 0
      %s56 = sshll.u32 %s3, 4
      %s57 = int_to_ptr.hbm [resolvable:$true] %s56
      %s58 = sshll.u32 [#allocation8], 4
      %s59 = int_to_ptr.vmem [resolvable:$true] %s58
      %64 = dma.hbm_to_vmem [thread:$0]  %s57, 4096, %s59, [#allocation9], 128, 128, 8
    $region17: #{tpu_custom_call.1} parent=1 // pred_fallthru
      _
    // Predicated region
    $region18: #{tpu_custom_call.1} parent=1 // pred_check
      _
    $region19: #{tpu_custom_call.1} parent=1 // pred_check_branch
      %66 = sbr.rel (0) target = $region21
    $region20: #{tpu_custom_call.1} parent=1 // pred_region
      _
    $region21: #{tpu_custom_call.1} parent=1 // pred_fallthru
      _
    // Predicated region
    $region22: #{tpu_custom_call.1} parent=1 // pred_check
      _
    $region23: #{tpu_custom_call.1} parent=1 // pred_check_branch
      %68 = sbr.rel (0) target = $region25
    $region24: #{tpu_custom_call.1} parent=1 // pred_region
      %70 = vsyncadd [#allocation9], 0
      %s71 = sshll.u32 %s5, 4
      %s72 = int_to_ptr.hbm [resolvable:$true] %s71
      %s73 = sshll.u32 [#allocation10], 4
      %s74 = int_to_ptr.vmem [resolvable:$true] %s73
      %79 = dma.hbm_to_vmem [thread:$0]  %s72, 14336, %s74, [#allocation9], 448, 448, 28
    $region25: #{tpu_custom_call.1} parent=1 // pred_fallthru
      _
    // Predicated region
    $region26: #{tpu_custom_call.1} parent=1 // pred_check
      _
    $region27: #{tpu_custom_call.1} parent=1 // pred_check_branch
      %81 = sbr.rel (0) target = $region29
    $region28: #{tpu_custom_call.1} parent=1 // pred_region
      %83 = vsyncadd [#allocation12], 0
      %s85 = sshll.u32 %s6, 4
      %s86 = int_to_ptr.hbm [resolvable:$true] %s85
      %s87 = sshll.u32 [#allocation11], 4
      %s88 = int_to_ptr.vmem [resolvable:$true] %s87
      %90 = dma.hbm_to_vmem [thread:$0]  %s86, 112, %s88, [#allocation12]
    $region29: #{tpu_custom_call.1} parent=1 // pred_fallthru
      _
    // Predicated region
    $region30: #{tpu_custom_call.1} parent=1 // pred_check
      _
    $region31: #{tpu_custom_call.1} parent=1 // pred_check_branch
      %92 = sbr.rel (0) target = $region33
    $region32: #{tpu_custom_call.1} parent=1 // pred_region
      %94 = dma.done [#allocation3], 64
    $region33: #{tpu_custom_call.1} parent=1 // pred_fallthru
      _
    // Predicated region
    $region34: #{tpu_custom_call.1} parent=1 // pred_check
      _
    $region35: #{tpu_custom_call.1} parent=1 // pred_check_branch
      %96 = sbr.rel (0) target = $region37
    $region36: #{tpu_custom_call.1} parent=1 // pred_region
      %98 = dma.done [#allocation6], 2048
    $region37: #{tpu_custom_call.1} parent=1 // pred_fallthru
      _
    // Predicated region
    $region38: #{tpu_custom_call.1} parent=1 // pred_check
      _
    $region39: #{tpu_custom_call.1} parent=1 // pred_check_branch
      %100 = sbr.rel (0) target = $region41
    $region40: #{tpu_custom_call.1} parent=1 // pred_region
      %102 = dma.done [#allocation6], 32
    $region41: #{tpu_custom_call.1} parent=1 // pred_fallthru
      _
    // Predicated region
    $region42: #{tpu_custom_call.1} parent=1 // pred_check
      _
    $region43: #{tpu_custom_call.1} parent=1 // pred_check_branch
      %104 = sbr.rel (0) target = $region45
    $region44: #{tpu_custom_call.1} parent=1 // pred_region
      %106 = dma.done [#allocation9], 4096
    $region45: #{tpu_custom_call.1} parent=1 // pred_fallthru
      _
    // Predicated region
    $region46: #{tpu_custom_call.1} parent=1 // pred_check
      _
    $region47: #{tpu_custom_call.1} parent=1 // pred_check_branch
      %108 = sbr.rel (0) target = $region49
    $region48: #{tpu_custom_call.1} parent=1 // pred_region
      %110 = dma.done [#allocation9], 14336
    $region49: #{tpu_custom_call.1} parent=1 // pred_fallthru
      _
    // Predicated region
    $region50: #{tpu_custom_call.1} parent=1 // pred_check
      _
    $region51: #{tpu_custom_call.1} parent=1 // pred_check_branch
      %112 = sbr.rel (0) target = $region53
    $region52: #{tpu_custom_call.1} parent=1 // pred_region
      %114 = dma.done [#allocation12], 112
    $region53: #{tpu_custom_call.1} parent=1 // pred_fallthru
      _
    %v115 = vld [vmem:[#allocation2] sm:$0xf]
    %v116 = vld [vmem:[#allocation5] sm:$0xff]
    %v117 = vld [vmem:[#allocation5 + $0x8] sm:$0xff]
    %v118 = vld [vmem:[#allocation5 + $0x10] sm:$0xff]
    %v119 = vld [vmem:[#allocation5 + $0x18] sm:$0xff]
    %v120 = vld [vmem:[#allocation5 + $0x20] sm:$0xff]
    %v121 = vld [vmem:[#allocation5 + $0x28] sm:$0xff]
    %v122 = vld [vmem:[#allocation5 + $0x30] sm:$0xff]
    %v123 = vld [vmem:[#allocation5 + $0x38] sm:$0xff]
    %v124 = vld [vmem:[#allocation5 + $0x40] sm:$0xff]
    %v125 = vld [vmem:[#allocation5 + $0x48] sm:$0xff]
    %v126 = vld [vmem:[#allocation5 + $0x50] sm:$0xff]
    %v127 = vld [vmem:[#allocation5 + $0x58] sm:$0xff]
    %v128 = vld [vmem:[#allocation5 + $0x60] sm:$0xff]
    %v129 = vld [vmem:[#allocation5 + $0x68] sm:$0xff]
    %v130 = vld [vmem:[#allocation5 + $0x70] sm:$0xff]
    %v131 = vld [vmem:[#allocation5 + $0x78] sm:$0xff]
    %v132 = vld [vmem:[#allocation7] sm:$0x3]
    %v134 = vperm.slane %v132, 0
    %v135 = vperm.slane %v132, 1
    %v154 = vunpack.c.l.b16 %v116
    %v155 = vunpack.c.h.b16 %v116
    %v156 = vunpack.c.l.b16 %v117
    %v157 = vunpack.c.h.b16 %v117
    %v158 = vunpack.c.l.b16 %v118
    %v159 = vunpack.c.h.b16 %v118
    %v160 = vunpack.c.l.b16 %v119
    %v161 = vunpack.c.h.b16 %v119
    %v162 = vunpack.c.l.b16 %v120
    %v163 = vunpack.c.h.b16 %v120
    %v164 = vunpack.c.l.b16 %v121
    %v165 = vunpack.c.h.b16 %v121
    %v166 = vunpack.c.l.b16 %v122
    %v167 = vunpack.c.h.b16 %v122
    %v168 = vunpack.c.l.b16 %v123
    %v169 = vunpack.c.h.b16 %v123
    %v170 = vunpack.c.l.b16 %v124
    %v171 = vunpack.c.h.b16 %v124
    %v172 = vunpack.c.l.b16 %v125
    %v173 = vunpack.c.h.b16 %v125
    %v174 = vunpack.c.l.b16 %v126
    %v175 = vunpack.c.h.b16 %v126
    %v176 = vunpack.c.l.b16 %v127
    %v177 = vunpack.c.h.b16 %v127
    %v178 = vunpack.c.l.b16 %v128
    %v179 = vunpack.c.h.b16 %v128
    %v180 = vunpack.c.l.b16 %v129
    %v181 = vunpack.c.h.b16 %v129
    %v182 = vunpack.c.l.b16 %v130
    %v183 = vunpack.c.h.b16 %v130
    %v184 = vunpack.c.l.b16 %v131
    %v185 = vunpack.c.h.b16 %v131
    %v186 = vpack.c.b16 %v156, %v154
    %v187 = vpack.c.b16 %v157, %v155
    %v188 = vpack.c.b16 %v160, %v158
    %v189 = vpack.c.b16 %v161, %v159
    %v190 = vpack.c.b16 %v164, %v162
    %v191 = vpack.c.b16 %v165, %v163
    %v192 = vpack.c.b16 %v168, %v166
    %v193 = vpack.c.b16 %v169, %v167
    %v194 = vpack.c.b16 %v172, %v170
    %v195 = vpack.c.b16 %v173, %v171
    %v196 = vpack.c.b16 %v176, %v174
    %v197 = vpack.c.b16 %v177, %v175
    %v198 = vpack.c.b16 %v180, %v178
    %v199 = vpack.c.b16 %v181, %v179
    %v200 = vpack.c.b16 %v184, %v182
    %v201 = vpack.c.b16 %v185, %v183
    %218 = vmatpush.bf16.msra.mxu0 %v200
    %219 = vmatpush.bf16.msra.mxu0 %v198
    %220 = vmatpush.bf16.msra.mxu0 %v196
    %221 = vmatpush.bf16.msra.mxu0 %v194
    %222 = vmatpush.bf16.msra.mxu0 %v192
    %223 = vmatpush.bf16.msra.mxu0 %v190
    %224 = vmatpush.bf16.msra.mxu0 %v188
    %225 = vmatpush.bf16.msra.mxu0 %v186
    %226 = vmatmul.bf16.gmra.mxu0 %v115
    %v227 = vpop.f32.mrf.mxu0
    %v228 = vadd.f32 %v134, %v227
    %v229 = vpop.f32.mrf.mxu0
    %230 = vdwg.mxu0
    %231 = vmatpush.bf16.msra.mxu0 %v201
    %232 = vmatpush.bf16.msra.mxu0 %v199
    %233 = vmatpush.bf16.msra.mxu0 %v197
    %234 = vmatpush.bf16.msra.mxu0 %v195
    %235 = vmatpush.bf16.msra.mxu0 %v193
    %236 = vmatpush.bf16.msra.mxu0 %v191
    %237 = vmatpush.bf16.msra.mxu0 %v189
    %238 = vmatpush.bf16.msra.mxu0 %v187
    %239 = vmatmul.bf16.gmra.mxu0 %v115
    %v240 = vpop.f32.mrf.mxu0
    %v241 = vadd.f32 %v135, %v240
    %v242 = vpop.f32.mrf.mxu0
    %243 = vdwg.mxu0
    %v244 = vmax.f32 %v228, 0.0
    %v245 = vmax.f32 %v241, 0.0
    %v246 = vpack.c.bf16 %v244, %v244
    %v247 = vpack.c.bf16 %v245, %v245
    %v248 = vld [vmem:[#allocation8] sm:$0xff]
    %v249 = vld [vmem:[#allocation8 + $0x8] sm:$0xff]
    %v250 = vld [vmem:[#allocation8 + $0x10] sm:$0xff]
    %v251 = vld [vmem:[#allocation8 + $0x18] sm:$0xff]
    %v252 = vld [vmem:[#allocation8 + $0x20] sm:$0xff]
    %v253 = vld [vmem:[#allocation8 + $0x28] sm:$0xff]
    %v254 = vld [vmem:[#allocation8 + $0x30] sm:$0xff]
    %v255 = vld [vmem:[#allocation8 + $0x38] sm:$0xff]
    %v256 = vld [vmem:[#allocation8 + $0x40] sm:$0xff]
    %v257 = vld [vmem:[#allocation8 + $0x48] sm:$0xff]
    %v258 = vld [vmem:[#allocation8 + $0x50] sm:$0xff]
    %v259 = vld [vmem:[#allocation8 + $0x58] sm:$0xff]
    %v260 = vld [vmem:[#allocation8 + $0x60] sm:$0xff]
    %v261 = vld [vmem:[#allocation8 + $0x68] sm:$0xff]
    %v262 = vld [vmem:[#allocation8 + $0x70] sm:$0xff]
    %v263 = vld [vmem:[#allocation8 + $0x78] sm:$0xff]
    %v264 = vld [vmem:[#allocation8 + $0x80] sm:$0xff]
    %v265 = vld [vmem:[#allocation8 + $0x88] sm:$0xff]
    %v266 = vld [vmem:[#allocation8 + $0x90] sm:$0xff]
    %v267 = vld [vmem:[#allocation8 + $0x98] sm:$0xff]
    %v268 = vld [vmem:[#allocation8 + $0xa0] sm:$0xff]
    %v269 = vld [vmem:[#allocation8 + $0xa8] sm:$0xff]
    %v270 = vld [vmem:[#allocation8 + $0xb0] sm:$0xff]
    %v271 = vld [vmem:[#allocation8 + $0xb8] sm:$0xff]
    %v272 = vld [vmem:[#allocation8 + $0xc0] sm:$0xff]
    %v273 = vld [vmem:[#allocation8 + $0xc8] sm:$0xff]
    %v274 = vld [vmem:[#allocation8 + $0xd0] sm:$0xff]
    %v275 = vld [vmem:[#allocation8 + $0xd8] sm:$0xff]
    %v276 = vld [vmem:[#allocation8 + $0xe0] sm:$0xff]
    %v277 = vld [vmem:[#allocation8 + $0xe8] sm:$0xff]
    %v278 = vld [vmem:[#allocation8 + $0xf0] sm:$0xff]
    %v279 = vld [vmem:[#allocation8 + $0xf8] sm:$0xff]
    %v280 = vld [vmem:[%s4] sm:$0x3]
    %v282 = vperm.slane %v280, 0
    %v283 = vperm.slane %v280, 1
    %v318 = vunpack.c.l.b16 %v248
    %v319 = vunpack.c.h.b16 %v248
    %v320 = vunpack.c.l.b16 %v249
    %v321 = vunpack.c.h.b16 %v249
    %v322 = vunpack.c.l.b16 %v250
    %v323 = vunpack.c.h.b16 %v250
    %v324 = vunpack.c.l.b16 %v251
    %v325 = vunpack.c.h.b16 %v251
    %v326 = vunpack.c.l.b16 %v252
    %v327 = vunpack.c.h.b16 %v252
    %v328 = vunpack.c.l.b16 %v253
    %v329 = vunpack.c.h.b16 %v253
    %v330 = vunpack.c.l.b16 %v254
    %v331 = vunpack.c.h.b16 %v254
    %v332 = vunpack.c.l.b16 %v255
    %v333 = vunpack.c.h.b16 %v255
    %v334 = vunpack.c.l.b16 %v256
    %v335 = vunpack.c.h.b16 %v256
    %v336 = vunpack.c.l.b16 %v257
    %v337 = vunpack.c.h.b16 %v257
    %v338 = vunpack.c.l.b16 %v258
    %v339 = vunpack.c.h.b16 %v258
    %v340 = vunpack.c.l.b16 %v259
    %v341 = vunpack.c.h.b16 %v259
    %v342 = vunpack.c.l.b16 %v260
    %v343 = vunpack.c.h.b16 %v260
    %v344 = vunpack.c.l.b16 %v261
    %v345 = vunpack.c.h.b16 %v261
    %v346 = vunpack.c.l.b16 %v262
    %v347 = vunpack.c.h.b16 %v262
    %v348 = vunpack.c.l.b16 %v263
    %v349 = vunpack.c.h.b16 %v263
    %v350 = vunpack.c.l.b16 %v264
    %v351 = vunpack.c.h.b16 %v264
    %v352 = vunpack.c.l.b16 %v265
    %v353 = vunpack.c.h.b16 %v265
    %v354 = vunpack.c.l.b16 %v266
    %v355 = vunpack.c.h.b16 %v266
    %v356 = vunpack.c.l.b16 %v267
    %v357 = vunpack.c.h.b16 %v267
    %v358 = vunpack.c.l.b16 %v268
    %v359 = vunpack.c.h.b16 %v268
    %v360 = vunpack.c.l.b16 %v269
    %v361 = vunpack.c.h.b16 %v269
    %v362 = vunpack.c.l.b16 %v270
    %v363 = vunpack.c.h.b16 %v270
    %v364 = vunpack.c.l.b16 %v271
    %v365 = vunpack.c.h.b16 %v271
    %v366 = vunpack.c.l.b16 %v272
    %v367 = vunpack.c.h.b16 %v272
    %v368 = vunpack.c.l.b16 %v273
    %v369 = vunpack.c.h.b16 %v273
    %v370 = vunpack.c.l.b16 %v274
    %v371 = vunpack.c.h.b16 %v274
    %v372 = vunpack.c.l.b16 %v275
    %v373 = vunpack.c.h.b16 %v275
    %v374 = vunpack.c.l.b16 %v276
    %v375 = vunpack.c.h.b16 %v276
    %v376 = vunpack.c.l.b16 %v277
    %v377 = vunpack.c.h.b16 %v277
    %v378 = vunpack.c.l.b16 %v278
    %v379 = vunpack.c.h.b16 %v278
    %v380 = vunpack.c.l.b16 %v279
    %v381 = vunpack.c.h.b16 %v279
    %v382 = vpack.c.b16 %v320, %v318
    %v383 = vpack.c.b16 %v321, %v319
    %v384 = vpack.c.b16 %v324, %v322
    %v385 = vpack.c.b16 %v325, %v323
    %v386 = vpack.c.b16 %v328, %v326
    %v387 = vpack.c.b16 %v329, %v327
    %v388 = vpack.c.b16 %v332, %v330
    %v389 = vpack.c.b16 %v333, %v331
    %v390 = vpack.c.b16 %v336, %v334
    %v391 = vpack.c.b16 %v337, %v335
    %v392 = vpack.c.b16 %v340, %v338
    %v393 = vpack.c.b16 %v341, %v339
    %v394 = vpack.c.b16 %v344, %v342
    %v395 = vpack.c.b16 %v345, %v343
    %v396 = vpack.c.b16 %v348, %v346
    %v397 = vpack.c.b16 %v349, %v347
    %v398 = vpack.c.b16 %v352, %v350
    %v399 = vpack.c.b16 %v353, %v351
    %v400 = vpack.c.b16 %v356, %v354
    %v401 = vpack.c.b16 %v357, %v355
    %v402 = vpack.c.b16 %v360, %v358
    %v403 = vpack.c.b16 %v361, %v359
    %v404 = vpack.c.b16 %v364, %v362
    %v405 = vpack.c.b16 %v365, %v363
    %v406 = vpack.c.b16 %v368, %v366
    %v407 = vpack.c.b16 %v369, %v367
    %v408 = vpack.c.b16 %v372, %v370
    %v409 = vpack.c.b16 %v373, %v371
    %v410 = vpack.c.b16 %v376, %v374
    %v411 = vpack.c.b16 %v377, %v375
    %v412 = vpack.c.b16 %v380, %v378
    %v413 = vpack.c.b16 %v381, %v379
    %446 = vmatpush.bf16.msra.mxu0 %v396
    %447 = vmatpush.bf16.msra.mxu0 %v394
    %448 = vmatpush.bf16.msra.mxu0 %v392
    %449 = vmatpush.bf16.msra.mxu0 %v390
    %450 = vmatpush.bf16.msra.mxu0 %v388
    %451 = vmatpush.bf16.msra.mxu0 %v386
    %452 = vmatpush.bf16.msra.mxu0 %v384
    %453 = vmatpush.bf16.msra.mxu0 %v382
    %454 = vmatmul.bf16.gmra.mxu0 %v246
    %v455 = vpop.f32.mrf.mxu0
    %v456 = vadd.f32 %v282, %v455
    %v457 = vpop.f32.mrf.mxu0
    %458 = vdwg.mxu0
    %459 = vmatpush.bf16.msra.mxu0 %v412
    %460 = vmatpush.bf16.msra.mxu0 %v410
    %461 = vmatpush.bf16.msra.mxu0 %v408
    %462 = vmatpush.bf16.msra.mxu0 %v406
    %463 = vmatpush.bf16.msra.mxu0 %v404
    %464 = vmatpush.bf16.msra.mxu0 %v402
    %465 = vmatpush.bf16.msra.mxu0 %v400
    %466 = vmatpush.bf16.msra.mxu0 %v398
    %467 = vmatmul.bf16.gmra.mxu0 %v247
    %v468 = vpop.f32.mrf.mxu0
    %v469 = vadd.f32 %v456, %v468
    %v470 = vpop.f32.mrf.mxu0
    %471 = vdwg.mxu0
    %472 = vmatpush.bf16.msra.mxu0 %v397
    %473 = vmatpush.bf16.msra.mxu0 %v395
    %474 = vmatpush.bf16.msra.mxu0 %v393
    %475 = vmatpush.bf16.msra.mxu0 %v391
    %476 = vmatpush.bf16.msra.mxu0 %v389
    %477 = vmatpush.bf16.msra.mxu0 %v387
    %478 = vmatpush.bf16.msra.mxu0 %v385
    %479 = vmatpush.bf16.msra.mxu0 %v383
    %480 = vmatmul.bf16.gmra.mxu0 %v246
    %v481 = vpop.f32.mrf.mxu0
    %v482 = vadd.f32 %v283, %v481
    %v483 = vpop.f32.mrf.mxu0
    %484 = vdwg.mxu0
    %485 = vmatpush.bf16.msra.mxu0 %v413
    %486 = vmatpush.bf16.msra.mxu0 %v411
    %487 = vmatpush.bf16.msra.mxu0 %v409
    %488 = vmatpush.bf16.msra.mxu0 %v407
    %489 = vmatpush.bf16.msra.mxu0 %v405
    %490 = vmatpush.bf16.msra.mxu0 %v403
    %491 = vmatpush.bf16.msra.mxu0 %v401
    %492 = vmatpush.bf16.msra.mxu0 %v399
    %493 = vmatmul.bf16.gmra.mxu0 %v247
    %v494 = vpop.f32.mrf.mxu0
    %v495 = vadd.f32 %v482, %v494
    %v496 = vpop.f32.mrf.mxu0
    %497 = vdwg.mxu0
    %v498 = vmax.f32 %v469, 0.0
    %v499 = vmax.f32 %v495, 0.0
    %v500 = vpack.c.bf16 %v498, %v498
    %v501 = vpack.c.bf16 %v499, %v499
    %v502 = vld [vmem:[#allocation10] sm:$0xff]
    %v503 = vld [vmem:[#allocation10 + $0x8] sm:$0xff]
    %v504 = vld [vmem:[#allocation10 + $0x10] sm:$0xff]
    %v505 = vld [vmem:[#allocation10 + $0x18] sm:$0xf]
    %v506 = vld [vmem:[#allocation10 + $0x1c] sm:$0xff]
    %v507 = vld [vmem:[#allocation10 + $0x24] sm:$0xff]
    %v508 = vld [vmem:[#allocation10 + $0x2c] sm:$0xff]
    %v509 = vld [vmem:[#allocation10 + $0x34] sm:$0xf]
    %v510 = vld [vmem:[#allocation10 + $0x38] sm:$0xff]
    %v511 = vld [vmem:[#allocation10 + $0x40] sm:$0xff]
    %v512 = vld [vmem:[#allocation10 + $0x48] sm:$0xff]
    %v513 = vld [vmem:[#allocation10 + $0x50] sm:$0xf]
    %v514 = vld [vmem:[#allocation10 + $0x54] sm:$0xff]
    %v515 = vld [vmem:[#allocation10 + $0x5c] sm:$0xff]
    %v516 = vld [vmem:[#allocation10 + $0x64] sm:$0xff]
    %v517 = vld [vmem:[#allocation10 + $0x6c] sm:$0xf]
    %v518 = vld [vmem:[#allocation10 + $0x70] sm:$0xff]
    %v519 = vld [vmem:[#allocation10 + $0x78] sm:$0xff]
    %v520 = vld [vmem:[#allocation10 + $0x80] sm:$0xff]
    %v521 = vld [vmem:[#allocation10 + $0x88] sm:$0xf]
    %v522 = vld [vmem:[#allocation10 + $0x8c] sm:$0xff]
    %v523 = vld [vmem:[#allocation10 + $0x94] sm:$0xff]
    %v524 = vld [vmem:[#allocation10 + $0x9c] sm:$0xff]
    %v525 = vld [vmem:[#allocation10 + $0xa4] sm:$0xf]
    %v526 = vld [vmem:[#allocation10 + $0xa8] sm:$0xff]
    %v527 = vld [vmem:[#allocation10 + $0xb0] sm:$0xff]
    %v528 = vld [vmem:[#allocation10 + $0xb8] sm:$0xff]
    %v529 = vld [vmem:[#allocation10 + $0xc0] sm:$0xf]
    %v530 = vld [vmem:[#allocation10 + $0xc4] sm:$0xff]
    %v531 = vld [vmem:[#allocation10 + $0xcc] sm:$0xff]
    %v532 = vld [vmem:[#allocation10 + $0xd4] sm:$0xff]
    %v533 = vld [vmem:[#allocation10 + $0xdc] sm:$0xf]
    %v534 = vld [vmem:[#allocation10 + $0xe0] sm:$0xff]
    %v535 = vld [vmem:[#allocation10 + $0xe8] sm:$0xff]
    %v536 = vld [vmem:[#allocation10 + $0xf0] sm:$0xff]
    %v537 = vld [vmem:[#allocation10 + $0xf8] sm:$0xf]
    %v538 = vld [vmem:[#allocation10 + $0xfc] sm:$0xff]
    %v539 = vld [vmem:[#allocation10 + $0x104] sm:$0xff]
    %v540 = vld [vmem:[#allocation10 + $0x10c] sm:$0xff]
    %v541 = vld [vmem:[#allocation10 + $0x114] sm:$0xf]
    %v542 = vld [vmem:[#allocation10 + $0x118] sm:$0xff]
    %v543 = vld [vmem:[#allocation10 + $0x120] sm:$0xff]
    %v544 = vld [vmem:[#allocation10 + $0x128] sm:$0xff]
    %v545 = vld [vmem:[#allocation10 + $0x130] sm:$0xf]
    %v546 = vld [vmem:[#allocation10 + $0x134] sm:$0xff]
    %v547 = vld [vmem:[#allocation10 + $0x13c] sm:$0xff]
    %v548 = vld [vmem:[#allocation10 + $0x144] sm:$0xff]
    %v549 = vld [vmem:[#allocation10 + $0x14c] sm:$0xf]
    %v550 = vld [vmem:[#allocation10 + $0x150] sm:$0xff]
    %v551 = vld [vmem:[#allocation10 + $0x158] sm:$0xff]
    %v552 = vld [vmem:[#allocation10 + $0x160] sm:$0xff]
    %v553 = vld [vmem:[#allocation10 + $0x168] sm:$0xf]
    %v554 = vld [vmem:[#allocation10 + $0x16c] sm:$0xff]
    %v555 = vld [vmem:[#allocation10 + $0x174] sm:$0xff]
    %v556 = vld [vmem:[#allocation10 + $0x17c] sm:$0xff]
    %v557 = vld [vmem:[#allocation10 + $0x184] sm:$0xf]
    %v558 = vld [vmem:[#allocation10 + $0x188] sm:$0xff]
    %v559 = vld [vmem:[#allocation10 + $0x190] sm:$0xff]
    %v560 = vld [vmem:[#allocation10 + $0x198] sm:$0xff]
    %v561 = vld [vmem:[#allocation10 + $0x1a0] sm:$0xf]
    %v562 = vld [vmem:[#allocation10 + $0x1a4] sm:$0xff]
    %v563 = vld [vmem:[#allocation10 + $0x1ac] sm:$0xff]
    %v564 = vld [vmem:[#allocation10 + $0x1b4] sm:$0xff]
    %v565 = vld [vmem:[#allocation10 + $0x1bc] sm:$0xf]
    %v566 = vld [vmem:[#allocation10 + $0x1c0] sm:$0xff]
    %v567 = vld [vmem:[#allocation10 + $0x1c8] sm:$0xff]
    %v568 = vld [vmem:[#allocation10 + $0x1d0] sm:$0xff]
    %v569 = vld [vmem:[#allocation10 + $0x1d8] sm:$0xf]
    %v570 = vld [vmem:[#allocation10 + $0x1dc] sm:$0xff]
    %v571 = vld [vmem:[#allocation10 + $0x1e4] sm:$0xff]
    %v572 = vld [vmem:[#allocation10 + $0x1ec] sm:$0xff]
    %v573 = vld [vmem:[#allocation10 + $0x1f4] sm:$0xf]
    %v574 = vld [vmem:[#allocation10 + $0x1f8] sm:$0xff]
    %v575 = vld [vmem:[#allocation10 + $0x200] sm:$0xff]
    %v576 = vld [vmem:[#allocation10 + $0x208] sm:$0xff]
    %v577 = vld [vmem:[#allocation10 + $0x210] sm:$0xf]
    %v578 = vld [vmem:[#allocation10 + $0x214] sm:$0xff]
    %v579 = vld [vmem:[#allocation10 + $0x21c] sm:$0xff]
    %v580 = vld [vmem:[#allocation10 + $0x224] sm:$0xff]
    %v581 = vld [vmem:[#allocation10 + $0x22c] sm:$0xf]
    %v582 = vld [vmem:[#allocation10 + $0x230] sm:$0xff]
    %v583 = vld [vmem:[#allocation10 + $0x238] sm:$0xff]
    %v584 = vld [vmem:[#allocation10 + $0x240] sm:$0xff]
    %v585 = vld [vmem:[#allocation10 + $0x248] sm:$0xf]
    %v586 = vld [vmem:[#allocation10 + $0x24c] sm:$0xff]
    %v587 = vld [vmem:[#allocation10 + $0x254] sm:$0xff]
    %v588 = vld [vmem:[#allocation10 + $0x25c] sm:$0xff]
    %v589 = vld [vmem:[#allocation10 + $0x264] sm:$0xf]
    %v590 = vld [vmem:[#allocation10 + $0x268] sm:$0xff]
    %v591 = vld [vmem:[#allocation10 + $0x270] sm:$0xff]
    %v592 = vld [vmem:[#allocation10 + $0x278] sm:$0xff]
    %v593 = vld [vmem:[#allocation10 + $0x280] sm:$0xf]
    %v594 = vld [vmem:[#allocation10 + $0x284] sm:$0xff]
    %v595 = vld [vmem:[#allocation10 + $0x28c] sm:$0xff]
    %v596 = vld [vmem:[#allocation10 + $0x294] sm:$0xff]
    %v597 = vld [vmem:[#allocation10 + $0x29c] sm:$0xf]
    %v598 = vld [vmem:[#allocation10 + $0x2a0] sm:$0xff]
    %v599 = vld [vmem:[#allocation10 + $0x2a8] sm:$0xff]
    %v600 = vld [vmem:[#allocation10 + $0x2b0] sm:$0xff]
    %v601 = vld [vmem:[#allocation10 + $0x2b8] sm:$0xf]
    %v602 = vld [vmem:[#allocation10 + $0x2bc] sm:$0xff]
    %v603 = vld [vmem:[#allocation10 + $0x2c4] sm:$0xff]
    %v604 = vld [vmem:[#allocation10 + $0x2cc] sm:$0xff]
    %v605 = vld [vmem:[#allocation10 + $0x2d4] sm:$0xf]
    %v606 = vld [vmem:[#allocation10 + $0x2d8] sm:$0xff]
    %v607 = vld [vmem:[#allocation10 + $0x2e0] sm:$0xff]
    %v608 = vld [vmem:[#allocation10 + $0x2e8] sm:$0xff]
    %v609 = vld [vmem:[#allocation10 + $0x2f0] sm:$0xf]
    %v610 = vld [vmem:[#allocation10 + $0x2f4] sm:$0xff]
    %v611 = vld [vmem:[#allocation10 + $0x2fc] sm:$0xff]
    %v612 = vld [vmem:[#allocation10 + $0x304] sm:$0xff]
    %v613 = vld [vmem:[#allocation10 + $0x30c] sm:$0xf]
    %v614 = vld [vmem:[#allocation10 + $0x310] sm:$0xff]
    %v615 = vld [vmem:[#allocation10 + $0x318] sm:$0xff]
    %v616 = vld [vmem:[#allocation10 + $0x320] sm:$0xff]
    %v617 = vld [vmem:[#allocation10 + $0x328] sm:$0xf]
    %v618 = vld [vmem:[#allocation10 + $0x32c] sm:$0xff]
    %v619 = vld [vmem:[#allocation10 + $0x334] sm:$0xff]
    %v620 = vld [vmem:[#allocation10 + $0x33c] sm:$0xff]
    %v621 = vld [vmem:[#allocation10 + $0x344] sm:$0xf]
    %v622 = vld [vmem:[#allocation10 + $0x348] sm:$0xff]
    %v623 = vld [vmem:[#allocation10 + $0x350] sm:$0xff]
    %v624 = vld [vmem:[#allocation10 + $0x358] sm:$0xff]
    %v625 = vld [vmem:[#allocation10 + $0x360] sm:$0xf]
    %v626 = vld [vmem:[#allocation10 + $0x364] sm:$0xff]
    %v627 = vld [vmem:[#allocation10 + $0x36c] sm:$0xff]
    %v628 = vld [vmem:[#allocation10 + $0x374] sm:$0xff]
    %v629 = vld [vmem:[#allocation10 + $0x37c] sm:$0xf]
    %v630 = vld [vmem:[#allocation11] sm:$0xff]
    %v632 = vperm.slane %v630, 0
    %v633 = vperm.slane %v630, 1
    %v634 = vperm.slane %v630, 2
    %v635 = vperm.slane %v630, 3
    %v636 = vperm.slane %v630, 4
    %v637 = vperm.slane %v630, 5
    %v638 = vperm.slane %v630, 6
    %v774 = vunpack.c.l.b16 %v502
    %v775 = vunpack.c.h.b16 %v502
    %v776 = vunpack.c.l.b16 %v503
    %v777 = vunpack.c.h.b16 %v503
    %v778 = vunpack.c.l.b16 %v504
    %v779 = vunpack.c.h.b16 %v504
    %v780 = vunpack.c.l.b16 %v505
    %v781 = vunpack.c.l.b16 %v506
    %v782 = vunpack.c.h.b16 %v506
    %v783 = vunpack.c.l.b16 %v507
    %v784 = vunpack.c.h.b16 %v507
    %v785 = vunpack.c.l.b16 %v508
    %v786 = vunpack.c.h.b16 %v508
    %v787 = vunpack.c.l.b16 %v509
    %v788 = vunpack.c.l.b16 %v510
    %v789 = vunpack.c.h.b16 %v510
    %v790 = vunpack.c.l.b16 %v511
    %v791 = vunpack.c.h.b16 %v511
    %v792 = vunpack.c.l.b16 %v512
    %v793 = vunpack.c.h.b16 %v512
    %v794 = vunpack.c.l.b16 %v513
    %v795 = vunpack.c.l.b16 %v514
    %v796 = vunpack.c.h.b16 %v514
    %v797 = vunpack.c.l.b16 %v515
    %v798 = vunpack.c.h.b16 %v515
    %v799 = vunpack.c.l.b16 %v516
    %v800 = vunpack.c.h.b16 %v516
    %v801 = vunpack.c.l.b16 %v517
    %v802 = vunpack.c.l.b16 %v518
    %v803 = vunpack.c.h.b16 %v518
    %v804 = vunpack.c.l.b16 %v519
    %v805 = vunpack.c.h.b16 %v519
    %v806 = vunpack.c.l.b16 %v520
    %v807 = vunpack.c.h.b16 %v520
    %v808 = vunpack.c.l.b16 %v521
    %v809 = vunpack.c.l.b16 %v522
    %v810 = vunpack.c.h.b16 %v522
    %v811 = vunpack.c.l.b16 %v523
    %v812 = vunpack.c.h.b16 %v523
    %v813 = vunpack.c.l.b16 %v524
    %v814 = vunpack.c.h.b16 %v524
    %v815 = vunpack.c.l.b16 %v525
    %v816 = vunpack.c.l.b16 %v526
    %v817 = vunpack.c.h.b16 %v526
    %v818 = vunpack.c.l.b16 %v527
    %v819 = vunpack.c.h.b16 %v527
    %v820 = vunpack.c.l.b16 %v528
    %v821 = vunpack.c.h.b16 %v528
    %v822 = vunpack.c.l.b16 %v529
    %v823 = vunpack.c.l.b16 %v530
    %v824 = vunpack.c.h.b16 %v530
    %v825 = vunpack.c.l.b16 %v531
    %v826 = vunpack.c.h.b16 %v531
    %v827 = vunpack.c.l.b16 %v532
    %v828 = vunpack.c.h.b16 %v532
    %v829 = vunpack.c.l.b16 %v533
    %v830 = vunpack.c.l.b16 %v534
    %v831 = vunpack.c.h.b16 %v534
    %v832 = vunpack.c.l.b16 %v535
    %v833 = vunpack.c.h.b16 %v535
    %v834 = vunpack.c.l.b16 %v536
    %v835 = vunpack.c.h.b16 %v536
    %v836 = vunpack.c.l.b16 %v537
    %v837 = vunpack.c.l.b16 %v538
    %v838 = vunpack.c.h.b16 %v538
    %v839 = vunpack.c.l.b16 %v539
    %v840 = vunpack.c.h.b16 %v539
    %v841 = vunpack.c.l.b16 %v540
    %v842 = vunpack.c.h.b16 %v540
    %v843 = vunpack.c.l.b16 %v541
    %v844 = vunpack.c.l.b16 %v542
    %v845 = vunpack.c.h.b16 %v542
    %v846 = vunpack.c.l.b16 %v543
    %v847 = vunpack.c.h.b16 %v543
    %v848 = vunpack.c.l.b16 %v544
    %v849 = vunpack.c.h.b16 %v544
    %v850 = vunpack.c.l.b16 %v545
    %v851 = vunpack.c.l.b16 %v546
    %v852 = vunpack.c.h.b16 %v546
    %v853 = vunpack.c.l.b16 %v547
    %v854 = vunpack.c.h.b16 %v547
    %v855 = vunpack.c.l.b16 %v548
    %v856 = vunpack.c.h.b16 %v548
    %v857 = vunpack.c.l.b16 %v549
    %v858 = vunpack.c.l.b16 %v550
    %v859 = vunpack.c.h.b16 %v550
    %v860 = vunpack.c.l.b16 %v551
    %v861 = vunpack.c.h.b16 %v551
    %v862 = vunpack.c.l.b16 %v552
    %v863 = vunpack.c.h.b16 %v552
    %v864 = vunpack.c.l.b16 %v553
    %v865 = vunpack.c.l.b16 %v554
    %v866 = vunpack.c.h.b16 %v554
    %v867 = vunpack.c.l.b16 %v555
    %v868 = vunpack.c.h.b16 %v555
    %v869 = vunpack.c.l.b16 %v556
    %v870 = vunpack.c.h.b16 %v556
    %v871 = vunpack.c.l.b16 %v557
    %v872 = vunpack.c.l.b16 %v558
    %v873 = vunpack.c.h.b16 %v558
    %v874 = vunpack.c.l.b16 %v559
    %v875 = vunpack.c.h.b16 %v559
    %v876 = vunpack.c.l.b16 %v560
    %v877 = vunpack.c.h.b16 %v560
    %v878 = vunpack.c.l.b16 %v561
    %v879 = vunpack.c.l.b16 %v562
    %v880 = vunpack.c.h.b16 %v562
    %v881 = vunpack.c.l.b16 %v563
    %v882 = vunpack.c.h.b16 %v563
    %v883 = vunpack.c.l.b16 %v564
    %v884 = vunpack.c.h.b16 %v564
    %v885 = vunpack.c.l.b16 %v565
    %v886 = vunpack.c.l.b16 %v566
    %v887 = vunpack.c.h.b16 %v566
    %v888 = vunpack.c.l.b16 %v567
    %v889 = vunpack.c.h.b16 %v567
    %v890 = vunpack.c.l.b16 %v568
    %v891 = vunpack.c.h.b16 %v568
    %v892 = vunpack.c.l.b16 %v569
    %v893 = vunpack.c.l.b16 %v570
    %v894 = vunpack.c.h.b16 %v570
    %v895 = vunpack.c.l.b16 %v571
    %v896 = vunpack.c.h.b16 %v571
    %v897 = vunpack.c.l.b16 %v572
    %v898 = vunpack.c.h.b16 %v572
    %v899 = vunpack.c.l.b16 %v573
    %v900 = vunpack.c.l.b16 %v574
    %v901 = vunpack.c.h.b16 %v574
    %v902 = vunpack.c.l.b16 %v575
    %v903 = vunpack.c.h.b16 %v575
    %v904 = vunpack.c.l.b16 %v576
    %v905 = vunpack.c.h.b16 %v576
    %v906 = vunpack.c.l.b16 %v577
    %v907 = vunpack.c.l.b16 %v578
    %v908 = vunpack.c.h.b16 %v578
    %v909 = vunpack.c.l.b16 %v579
    %v910 = vunpack.c.h.b16 %v579
    %v911 = vunpack.c.l.b16 %v580
    %v912 = vunpack.c.h.b16 %v580
    %v913 = vunpack.c.l.b16 %v581
    %v914 = vunpack.c.l.b16 %v582
    %v915 = vunpack.c.h.b16 %v582
    %v916 = vunpack.c.l.b16 %v583
    %v917 = vunpack.c.h.b16 %v583
    %v918 = vunpack.c.l.b16 %v584
    %v919 = vunpack.c.h.b16 %v584
    %v920 = vunpack.c.l.b16 %v585
    %v921 = vunpack.c.l.b16 %v586
    %v922 = vunpack.c.h.b16 %v586
    %v923 = vunpack.c.l.b16 %v587
    %v924 = vunpack.c.h.b16 %v587
    %v925 = vunpack.c.l.b16 %v588
    %v926 = vunpack.c.h.b16 %v588
    %v927 = vunpack.c.l.b16 %v589
    %v928 = vunpack.c.l.b16 %v590
    %v929 = vunpack.c.h.b16 %v590
    %v930 = vunpack.c.l.b16 %v591
    %v931 = vunpack.c.h.b16 %v591
    %v932 = vunpack.c.l.b16 %v592
    %v933 = vunpack.c.h.b16 %v592
    %v934 = vunpack.c.l.b16 %v593
    %v935 = vunpack.c.l.b16 %v594
    %v936 = vunpack.c.h.b16 %v594
    %v937 = vunpack.c.l.b16 %v595
    %v938 = vunpack.c.h.b16 %v595
    %v939 = vunpack.c.l.b16 %v596
    %v940 = vunpack.c.h.b16 %v596
    %v941 = vunpack.c.l.b16 %v597
    %v942 = vunpack.c.l.b16 %v598
    %v943 = vunpack.c.h.b16 %v598
    %v944 = vunpack.c.l.b16 %v599
    %v945 = vunpack.c.h.b16 %v599
    %v946 = vunpack.c.l.b16 %v600
    %v947 = vunpack.c.h.b16 %v600
    %v948 = vunpack.c.l.b16 %v601
    %v949 = vunpack.c.l.b16 %v602
    %v950 = vunpack.c.h.b16 %v602
    %v951 = vunpack.c.l.b16 %v603
    %v952 = vunpack.c.h.b16 %v603
    %v953 = vunpack.c.l.b16 %v604
    %v954 = vunpack.c.h.b16 %v604
    %v955 = vunpack.c.l.b16 %v605
    %v956 = vunpack.c.l.b16 %v606
    %v957 = vunpack.c.h.b16 %v606
    %v958 = vunpack.c.l.b16 %v607
    %v959 = vunpack.c.h.b16 %v607
    %v960 = vunpack.c.l.b16 %v608
    %v961 = vunpack.c.h.b16 %v608
    %v962 = vunpack.c.l.b16 %v609
    %v963 = vunpack.c.l.b16 %v610
    %v964 = vunpack.c.h.b16 %v610
    %v965 = vunpack.c.l.b16 %v611
    %v966 = vunpack.c.h.b16 %v611
    %v967 = vunpack.c.l.b16 %v612
    %v968 = vunpack.c.h.b16 %v612
    %v969 = vunpack.c.l.b16 %v613
    %v970 = vunpack.c.l.b16 %v614
    %v971 = vunpack.c.h.b16 %v614
    %v972 = vunpack.c.l.b16 %v615
    %v973 = vunpack.c.h.b16 %v615
    %v974 = vunpack.c.l.b16 %v616
    %v975 = vunpack.c.h.b16 %v616
    %v976 = vunpack.c.l.b16 %v617
    %v977 = vunpack.c.l.b16 %v618
    %v978 = vunpack.c.h.b16 %v618
    %v979 = vunpack.c.l.b16 %v619
    %v980 = vunpack.c.h.b16 %v619
    %v981 = vunpack.c.l.b16 %v620
    %v982 = vunpack.c.h.b16 %v620
    %v983 = vunpack.c.l.b16 %v621
    %v984 = vunpack.c.l.b16 %v622
    %v985 = vunpack.c.h.b16 %v622
    %v986 = vunpack.c.l.b16 %v623
    %v987 = vunpack.c.h.b16 %v623
    %v988 = vunpack.c.l.b16 %v624
    %v989 = vunpack.c.h.b16 %v624
    %v990 = vunpack.c.l.b16 %v625
    %v991 = vunpack.c.l.b16 %v626
    %v992 = vunpack.c.h.b16 %v626
    %v993 = vunpack.c.l.b16 %v627
    %v994 = vunpack.c.h.b16 %v627
    %v995 = vunpack.c.l.b16 %v628
    %v996 = vunpack.c.h.b16 %v628
    %v997 = vunpack.c.l.b16 %v629
    %v998 = vpack.c.b16 %v781, %v774
    %v999 = vpack.c.b16 %v782, %v775
    %v1000 = vpack.c.b16 %v783, %v776
    %v1001 = vpack.c.b16 %v784, %v777
    %v1002 = vpack.c.b16 %v785, %v778
    %v1003 = vpack.c.b16 %v786, %v779
    %v1004 = vpack.c.b16 %v787, %v780
    %v1005 = vpack.c.b16 %v795, %v788
    %v1006 = vpack.c.b16 %v796, %v789
    %v1007 = vpack.c.b16 %v797, %v790
    %v1008 = vpack.c.b16 %v798, %v791
    %v1009 = vpack.c.b16 %v799, %v792
    %v1010 = vpack.c.b16 %v800, %v793
    %v1011 = vpack.c.b16 %v801, %v794
    %v1012 = vpack.c.b16 %v809, %v802
    %v1013 = vpack.c.b16 %v810, %v803
    %v1014 = vpack.c.b16 %v811, %v804
    %v1015 = vpack.c.b16 %v812, %v805
    %v1016 = vpack.c.b16 %v813, %v806
    %v1017 = vpack.c.b16 %v814, %v807
    %v1018 = vpack.c.b16 %v815, %v808
    %v1019 = vpack.c.b16 %v823, %v816
    %v1020 = vpack.c.b16 %v824, %v817
    %v1021 = vpack.c.b16 %v825, %v818
    %v1022 = vpack.c.b16 %v826, %v819
    %v1023 = vpack.c.b16 %v827, %v820
    %v1024 = vpack.c.b16 %v828, %v821
    %v1025 = vpack.c.b16 %v829, %v822
    %v1026 = vpack.c.b16 %v837, %v830
    %v1027 = vpack.c.b16 %v838, %v831
    %v1028 = vpack.c.b16 %v839, %v832
    %v1029 = vpack.c.b16 %v840, %v833
    %v1030 = vpack.c.b16 %v841, %v834
    %v1031 = vpack.c.b16 %v842, %v835
    %v1032 = vpack.c.b16 %v843, %v836
    %v1033 = vpack.c.b16 %v851, %v844
    %v1034 = vpack.c.b16 %v852, %v845
    %v1035 = vpack.c.b16 %v853, %v846
    %v1036 = vpack.c.b16 %v854, %v847
    %v1037 = vpack.c.b16 %v855, %v848
    %v1038 = vpack.c.b16 %v856, %v849
    %v1039 = vpack.c.b16 %v857, %v850
    %v1040 = vpack.c.b16 %v865, %v858
    %v1041 = vpack.c.b16 %v866, %v859
    %v1042 = vpack.c.b16 %v867, %v860
    %v1043 = vpack.c.b16 %v868, %v861
    %v1044 = vpack.c.b16 %v869, %v862
    %v1045 = vpack.c.b16 %v870, %v863
    %v1046 = vpack.c.b16 %v871, %v864
    %v1047 = vpack.c.b16 %v879, %v872
    %v1048 = vpack.c.b16 %v880, %v873
    %v1049 = vpack.c.b16 %v881, %v874
    %v1050 = vpack.c.b16 %v882, %v875
    %v1051 = vpack.c.b16 %v883, %v876
    %v1052 = vpack.c.b16 %v884, %v877
    %v1053 = vpack.c.b16 %v885, %v878
    %v1054 = vpack.c.b16 %v893, %v886
    %v1055 = vpack.c.b16 %v894, %v887
    %v1056 = vpack.c.b16 %v895, %v888
    %v1057 = vpack.c.b16 %v896, %v889
    %v1058 = vpack.c.b16 %v897, %v890
    %v1059 = vpack.c.b16 %v898, %v891
    %v1060 = vpack.c.b16 %v899, %v892
    %v1061 = vpack.c.b16 %v907, %v900
    %v1062 = vpack.c.b16 %v908, %v901
    %v1063 = vpack.c.b16 %v909, %v902
    %v1064 = vpack.c.b16 %v910, %v903
    %v1065 = vpack.c.b16 %v911, %v904
    %v1066 = vpack.c.b16 %v912, %v905
    %v1067 = vpack.c.b16 %v913, %v906
    %v1068 = vpack.c.b16 %v921, %v914
    %v1069 = vpack.c.b16 %v922, %v915
    %v1070 = vpack.c.b16 %v923, %v916
    %v1071 = vpack.c.b16 %v924, %v917
    %v1072 = vpack.c.b16 %v925, %v918
    %v1073 = vpack.c.b16 %v926, %v919
    %v1074 = vpack.c.b16 %v927, %v920
    %v1075 = vpack.c.b16 %v935, %v928
    %v1076 = vpack.c.b16 %v936, %v929
    %v1077 = vpack.c.b16 %v937, %v930
    %v1078 = vpack.c.b16 %v938, %v931
    %v1079 = vpack.c.b16 %v939, %v932
    %v1080 = vpack.c.b16 %v940, %v933
    %v1081 = vpack.c.b16 %v941, %v934
    %v1082 = vpack.c.b16 %v949, %v942
    %v1083 = vpack.c.b16 %v950, %v943
    %v1084 = vpack.c.b16 %v951, %v944
    %v1085 = vpack.c.b16 %v952, %v945
    %v1086 = vpack.c.b16 %v953, %v946
    %v1087 = vpack.c.b16 %v954, %v947
    %v1088 = vpack.c.b16 %v955, %v948
    %v1089 = vpack.c.b16 %v963, %v956
    %v1090 = vpack.c.b16 %v964, %v957
    %v1091 = vpack.c.b16 %v965, %v958
    %v1092 = vpack.c.b16 %v966, %v959
    %v1093 = vpack.c.b16 %v967, %v960
    %v1094 = vpack.c.b16 %v968, %v961
    %v1095 = vpack.c.b16 %v969, %v962
    %v1096 = vpack.c.b16 %v977, %v970
    %v1097 = vpack.c.b16 %v978, %v971
    %v1098 = vpack.c.b16 %v979, %v972
    %v1099 = vpack.c.b16 %v980, %v973
    %v1100 = vpack.c.b16 %v981, %v974
    %v1101 = vpack.c.b16 %v982, %v975
    %v1102 = vpack.c.b16 %v983, %v976
    %v1103 = vpack.c.b16 %v991, %v984
    %v1104 = vpack.c.b16 %v992, %v985
    %v1105 = vpack.c.b16 %v993, %v986
    %v1106 = vpack.c.b16 %v994, %v987
    %v1107 = vpack.c.b16 %v995, %v988
    %v1108 = vpack.c.b16 %v996, %v989
    %v1109 = vpack.c.b16 %v997, %v990
    %1222 = vmatpush.bf16.msra.mxu0 %v1047
    %1223 = vmatpush.bf16.msra.mxu0 %v1040
    %1224 = vmatpush.bf16.msra.mxu0 %v1033
    %1225 = vmatpush.bf16.msra.mxu0 %v1026
    %1226 = vmatpush.bf16.msra.mxu0 %v1019
    %1227 = vmatpush.bf16.msra.mxu0 %v1012
    %1228 = vmatpush.bf16.msra.mxu0 %v1005
    %1229 = vmatpush.bf16.msra.mxu0 %v998
    %1230 = vmatmul.bf16.gmra.mxu0 %v500
    %v1231 = vpop.f32.mrf.mxu0
    %v1232 = vadd.f32 %v632, %v1231
    %v1233 = vpop.f32.mrf.mxu0
    %1234 = vdwg.mxu0
    %1235 = vmatpush.bf16.msra.mxu0 %v1103
    %1236 = vmatpush.bf16.msra.mxu0 %v1096
    %1237 = vmatpush.bf16.msra.mxu0 %v1089
    %1238 = vmatpush.bf16.msra.mxu0 %v1082
    %1239 = vmatpush.bf16.msra.mxu0 %v1075
    %1240 = vmatpush.bf16.msra.mxu0 %v1068
    %1241 = vmatpush.bf16.msra.mxu0 %v1061
    %1242 = vmatpush.bf16.msra.mxu0 %v1054
    %1243 = vmatmul.bf16.gmra.mxu0 %v501
    %v1244 = vpop.f32.mrf.mxu0
    %v1245 = vadd.f32 %v1232, %v1244
    %v1246 = vpop.f32.mrf.mxu0
    %1247 = vdwg.mxu0
    %1248 = vmatpush.bf16.msra.mxu0 %v1048
    %1249 = vmatpush.bf16.msra.mxu0 %v1041
    %1250 = vmatpush.bf16.msra.mxu0 %v1034
    %1251 = vmatpush.bf16.msra.mxu0 %v1027
    %1252 = vmatpush.bf16.msra.mxu0 %v1020
    %1253 = vmatpush.bf16.msra.mxu0 %v1013
    %1254 = vmatpush.bf16.msra.mxu0 %v1006
    %1255 = vmatpush.bf16.msra.mxu0 %v999
    %1256 = vmatmul.bf16.gmra.mxu0 %v500
    %v1257 = vpop.f32.mrf.mxu0
    %v1258 = vadd.f32 %v633, %v1257
    %v1259 = vpop.f32.mrf.mxu0
    %1260 = vdwg.mxu0
    %1261 = vmatpush.bf16.msra.mxu0 %v1104
    %1262 = vmatpush.bf16.msra.mxu0 %v1097
    %1263 = vmatpush.bf16.msra.mxu0 %v1090
    %1264 = vmatpush.bf16.msra.mxu0 %v1083
    %1265 = vmatpush.bf16.msra.mxu0 %v1076
    %1266 = vmatpush.bf16.msra.mxu0 %v1069
    %1267 = vmatpush.bf16.msra.mxu0 %v1062
    %1268 = vmatpush.bf16.msra.mxu0 %v1055
    %1269 = vmatmul.bf16.gmra.mxu0 %v501
    %v1270 = vpop.f32.mrf.mxu0
    %v1271 = vadd.f32 %v1258, %v1270
    %v1272 = vpop.f32.mrf.mxu0
    %1273 = vdwg.mxu0
    %1274 = vmatpush.bf16.msra.mxu0 %v1049
    %1275 = vmatpush.bf16.msra.mxu0 %v1042
    %1276 = vmatpush.bf16.msra.mxu0 %v1035
    %1277 = vmatpush.bf16.msra.mxu0 %v1028
    %1278 = vmatpush.bf16.msra.mxu0 %v1021
    %1279 = vmatpush.bf16.msra.mxu0 %v1014
    %1280 = vmatpush.bf16.msra.mxu0 %v1007
    %1281 = vmatpush.bf16.msra.mxu0 %v1000
    %1282 = vmatmul.bf16.gmra.mxu0 %v500
    %v1283 = vpop.f32.mrf.mxu0
    %v1284 = vadd.f32 %v634, %v1283
    %v1285 = vpop.f32.mrf.mxu0
    %1286 = vdwg.mxu0
    %1287 = vmatpush.bf16.msra.mxu0 %v1105
    %1288 = vmatpush.bf16.msra.mxu0 %v1098
    %1289 = vmatpush.bf16.msra.mxu0 %v1091
    %1290 = vmatpush.bf16.msra.mxu0 %v1084
    %1291 = vmatpush.bf16.msra.mxu0 %v1077
    %1292 = vmatpush.bf16.msra.mxu0 %v1070
    %1293 = vmatpush.bf16.msra.mxu0 %v1063
    %1294 = vmatpush.bf16.msra.mxu0 %v1056
    %1295 = vmatmul.bf16.gmra.mxu0 %v501
    %v1296 = vpop.f32.mrf.mxu0
    %v1297 = vadd.f32 %v1284, %v1296
    %v1298 = vpop.f32.mrf.mxu0
    %1299 = vdwg.mxu0
    %1300 = vmatpush.bf16.msra.mxu0 %v1050
    %1301 = vmatpush.bf16.msra.mxu0 %v1043
    %1302 = vmatpush.bf16.msra.mxu0 %v1036
    %1303 = vmatpush.bf16.msra.mxu0 %v1029
    %1304 = vmatpush.bf16.msra.mxu0 %v1022
    %1305 = vmatpush.bf16.msra.mxu0 %v1015
    %1306 = vmatpush.bf16.msra.mxu0 %v1008
    %1307 = vmatpush.bf16.msra.mxu0 %v1001
    %1308 = vmatmul.bf16.gmra.mxu0 %v500
    %v1309 = vpop.f32.mrf.mxu0
    %v1310 = vadd.f32 %v635, %v1309
    %v1311 = vpop.f32.mrf.mxu0
    %1312 = vdwg.mxu0
    %1313 = vmatpush.bf16.msra.mxu0 %v1106
    %1314 = vmatpush.bf16.msra.mxu0 %v1099
    %1315 = vmatpush.bf16.msra.mxu0 %v1092
    %1316 = vmatpush.bf16.msra.mxu0 %v1085
    %1317 = vmatpush.bf16.msra.mxu0 %v1078
    %1318 = vmatpush.bf16.msra.mxu0 %v1071
    %1319 = vmatpush.bf16.msra.mxu0 %v1064
    %1320 = vmatpush.bf16.msra.mxu0 %v1057
    %1321 = vmatmul.bf16.gmra.mxu0 %v501
    %v1322 = vpop.f32.mrf.mxu0
    %v1323 = vadd.f32 %v1310, %v1322
    %v1324 = vpop.f32.mrf.mxu0
    %1325 = vdwg.mxu0
    %1326 = vmatpush.bf16.msra.mxu0 %v1051
    %1327 = vmatpush.bf16.msra.mxu0 %v1044
    %1328 = vmatpush.bf16.msra.mxu0 %v1037
    %1329 = vmatpush.bf16.msra.mxu0 %v1030
    %1330 = vmatpush.bf16.msra.mxu0 %v1023
    %1331 = vmatpush.bf16.msra.mxu0 %v1016
    %1332 = vmatpush.bf16.msra.mxu0 %v1009
    %1333 = vmatpush.bf16.msra.mxu0 %v1002
    %1334 = vmatmul.bf16.gmra.mxu0 %v500
    %v1335 = vpop.f32.mrf.mxu0
    %v1336 = vadd.f32 %v636, %v1335
    %v1337 = vpop.f32.mrf.mxu0
    %1338 = vdwg.mxu0
    %1339 = vmatpush.bf16.msra.mxu0 %v1107
    %1340 = vmatpush.bf16.msra.mxu0 %v1100
    %1341 = vmatpush.bf16.msra.mxu0 %v1093
    %1342 = vmatpush.bf16.msra.mxu0 %v1086
    %1343 = vmatpush.bf16.msra.mxu0 %v1079
    %1344 = vmatpush.bf16.msra.mxu0 %v1072
    %1345 = vmatpush.bf16.msra.mxu0 %v1065
    %1346 = vmatpush.bf16.msra.mxu0 %v1058
    %1347 = vmatmul.bf16.gmra.mxu0 %v501
    %v1348 = vpop.f32.mrf.mxu0
    %v1349 = vadd.f32 %v1336, %v1348
    %v1350 = vpop.f32.mrf.mxu0
    %1351 = vdwg.mxu0
    %1352 = vmatpush.bf16.msra.mxu0 %v1052
    %1353 = vmatpush.bf16.msra.mxu0 %v1045
    %1354 = vmatpush.bf16.msra.mxu0 %v1038
    %1355 = vmatpush.bf16.msra.mxu0 %v1031
    %1356 = vmatpush.bf16.msra.mxu0 %v1024
    %1357 = vmatpush.bf16.msra.mxu0 %v1017
    %1358 = vmatpush.bf16.msra.mxu0 %v1010
    %1359 = vmatpush.bf16.msra.mxu0 %v1003
    %1360 = vmatmul.bf16.gmra.mxu0 %v500
    %v1361 = vpop.f32.mrf.mxu0
    %v1362 = vadd.f32 %v637, %v1361
    %v1363 = vpop.f32.mrf.mxu0
    %1364 = vdwg.mxu0
    %1365 = vmatpush.bf16.msra.mxu0 %v1108
    %1366 = vmatpush.bf16.msra.mxu0 %v1101
    %1367 = vmatpush.bf16.msra.mxu0 %v1094
    %1368 = vmatpush.bf16.msra.mxu0 %v1087
    %1369 = vmatpush.bf16.msra.mxu0 %v1080
    %1370 = vmatpush.bf16.msra.mxu0 %v1073
    %1371 = vmatpush.bf16.msra.mxu0 %v1066
    %1372 = vmatpush.bf16.msra.mxu0 %v1059
    %1373 = vmatmul.bf16.gmra.mxu0 %v501
    %v1374 = vpop.f32.mrf.mxu0
    %v1375 = vadd.f32 %v1362, %v1374
    %v1376 = vpop.f32.mrf.mxu0
    %1377 = vdwg.mxu0
    %1378 = vmatpush.bf16.msra.mxu0 %v1053
    %1379 = vmatpush.bf16.msra.mxu0 %v1046
    %1380 = vmatpush.bf16.msra.mxu0 %v1039
    %1381 = vmatpush.bf16.msra.mxu0 %v1032
    %1382 = vmatpush.bf16.msra.mxu0 %v1025
    %1383 = vmatpush.bf16.msra.mxu0 %v1018
    %1384 = vmatpush.bf16.msra.mxu0 %v1011
    %1385 = vmatpush.bf16.msra.mxu0 %v1004
    %1386 = vmatmul.bf16.gmra.mxu0 %v500
    %v1387 = vpop.f32.mrf.mxu0
    %v1388 = vadd.f32 %v638, %v1387
    %v1389 = vpop.f32.mrf.mxu0
    %1390 = vdwg.mxu0
    %1391 = vmatpush.bf16.msra.mxu0 %v1109
    %1392 = vmatpush.bf16.msra.mxu0 %v1102
    %1393 = vmatpush.bf16.msra.mxu0 %v1095
    %1394 = vmatpush.bf16.msra.mxu0 %v1088
    %1395 = vmatpush.bf16.msra.mxu0 %v1081
    %1396 = vmatpush.bf16.msra.mxu0 %v1074
    %1397 = vmatpush.bf16.msra.mxu0 %v1067
    %1398 = vmatpush.bf16.msra.mxu0 %v1060
    %1399 = vmatmul.bf16.gmra.mxu0 %v501
    %v1400 = vpop.f32.mrf.mxu0
    %v1401 = vadd.f32 %v1388, %v1400
    %v1402 = vpop.f32.mrf.mxu0
    %1403 = vdwg.mxu0
    %v1404 = vtanh.pop %v1245
    %v1405 = vtanh.pop %v1271
    %v1406 = vtanh.pop %v1297
    %v1407 = vtanh.pop %v1323
    %v1408 = vtanh.pop %v1349
    %v1409 = vtanh.pop %v1375
    %v1410 = vtanh.pop %v1401
    %1411 = vst [vmem:[#allocation13] sm:$0xff] %v1404
    %1412 = vst [vmem:[#allocation13 + $0x8] sm:$0xff] %v1405
    %1413 = vst [vmem:[#allocation13 + $0x10] sm:$0xff] %v1406
    %1414 = vst [vmem:[#allocation13 + $0x18] sm:$0xff] %v1407
    %1415 = vst [vmem:[#allocation13 + $0x20] sm:$0xff] %v1408
    %1416 = vst [vmem:[#allocation13 + $0x28] sm:$0xff] %v1409
    %1417 = vst [vmem:[#allocation13 + $0x30] sm:$0xff] %v1410
    // Predicated region
    $region54: #{tpu_custom_call.1} parent=1 // pred_check
      _
    $region55: #{tpu_custom_call.1} parent=1 // pred_check_branch
      %1419 = sbr.rel (0) target = $region57
    $region56: #{tpu_custom_call.1} parent=1 // pred_region
      %1421 = vsyncadd [#allocation4], 0
      %s1423 = sshll.u32 [#allocation13], 4
      %s1424 = int_to_ptr.vmem [resolvable:$true] %s1423
      %s1425 = sshll.u32 %s7, 4
      %s1426 = int_to_ptr.hbm [resolvable:$true] %s1425
      %1428 = dma.vmem_to_hbm [thread:$0]  %s1424, 896, %s1426, [#allocation4]
    $region57: #{tpu_custom_call.1} parent=1 // pred_fallthru
      _
    // Predicated region
    $region58: #{tpu_custom_call.1} parent=1 // pred_check
      _
    $region59: #{tpu_custom_call.1} parent=1 // pred_check_branch
      %1430 = sbr.rel (0) target = $region61
    $region60: #{tpu_custom_call.1} parent=1 // pred_region
      %1432 = dma.done [#allocation4], 896
    $region61: #{tpu_custom_call.1} parent=1 // pred_fallthru
      _
    %1433 = vsyncpa [#allocation3], 1
    %1434 = vsyncpa [#allocation6], 1
    %1435 = vsyncpa [#allocation9], 1
    %1436 = vsyncpa [#allocation12], 1
    %1437 = vsyncpa [#allocation4], 1

</llo_original>
